<compile_context>
chip_gen: v6e
topology: v6e:2x2x1
jax: 0.10.0
libtpu: 0.0.40
codegen_flags: <defaults>
</compile_context>

<pallas_src>
import functools
import math

import jax
import jax.numpy as jnp
from jax.experimental import pallas as pl
from jax.experimental.pallas import tpu as pltpu


_LANE = 128


def _round_up(x, m):
    return ((x + m - 1) // m) * m


def _pad_last(x, to):
    pad = to - x.shape[-1]
    if pad == 0:
        return x
    return jnp.pad(x, [(0, 0)] * (x.ndim - 1) + [(0, pad)])


def _pick_tile(total, pref, align):
    """Largest multiple of `align` that divides `total` and is <= `pref`.
    Falls back to `total` itself (block dim == array dim is always legal)."""
    cand = (min(pref, total) // align) * align
    while cand >= align:
        if total % cand == 0:
            return cand
        cand -= align
    return total


def _pick_row_tile(total, pref, align=16):
    """Like _pick_tile but prefers an even block count >= 2 so the 'parallel'
    row axis splits evenly across v7x's two TensorCores."""
    best_any = None
    cand = (min(pref, total) // align) * align
    while cand >= align:
        if total % cand == 0:
            if best_any is None:
                best_any = cand
            if (total // cand) % 2 == 0:
                return cand
        cand -= align
    return best_any if best_any is not None else total


def _vmem_limit_bytes():
    """Per-generation VMEM budget: ~85% of physical, capped well under v5e/v6e
    128 MiB and v7x 64 MiB; conservative fallback if the query is unavailable."""
    try:
        cap = int(pltpu.get_tpu_info().vmem_capacity_bytes)
    except Exception:
        cap = 64 * 1024 * 1024
    return max(32 * 1024 * 1024, min(int(cap * 0.85), 112 * 1024 * 1024))


# --------------------------- Pallas kernels ---------------------------

def _latent_softmax_kernel(xT_ref, w1t_ref, b1_ref, w2t_ref, b2_ref, o1_ref, o2_ref):
    """Both to_latent Linears (ldepth == 0) + softmax, transposed layout:
    inputs (r, nt-tile), outputs (rp, nt-tile)  -> lane-dense stores, no host
    transpose (the consumer needs latents.t().reshape(-1) anyway)."""
    xT = xT_ref[...]                                     # (r, tnt) bf16

    def _softmax_t(wt, b):                               # wt: (rp, r), b: (rp, 1)
        logits = jnp.dot(wt, xT, preferred_element_type=jnp.float32) + b
        m = jnp.max(logits, axis=0, keepdims=True)
        e = jnp.exp(logits - m)
        # exact divide: O(rp*nt), off the hot path; keeps reference comparison tight.
        return e / jnp.sum(e, axis=0, keepdims=True)

    o1_ref[...] = _softmax_t(w1t_ref[...], b1_ref[...])
    o2_ref[...] = _softmax_t(w2t_ref[...], b2_ref[...])


def _mm_bias_relu_kernel(a_ref, w_ref, b_ref, o_ref, acc_ref, *, tk, w_resident):
    """h = relu(colnorm(A1) @ W1.view(rp*n, e) + b1), tiled over (row, K) blocks.
    When w_resident, w_ref is the whole (rp*n, emb_p) array living in VMEM and is
    sliced in-kernel (no per-row-block re-stream of W)."""
    k = pl.program_id(1)

    @pl.when(k == 0)
    def _():
        acc_ref[...] = jnp.zeros_like(acc_ref)

    if w_resident:
        kk = pl.multiple_of(k * tk, tk)
        w = w_ref[pl.ds(kk, tk), :]
    else:
        w = w_ref[...]
    acc_ref[...] += jnp.dot(a_ref[...], w, preferred_element_type=jnp.float32)

    @pl.when(k == pl.num_programs(1) - 1)
    def _():
        o_ref[...] = jnp.maximum(acc_ref[...] + b_ref[...], 0.0).astype(o_ref.dtype)


def _layer2_fused_kernel(a2_ref, h_ref, w2_ref, b2_ref, o_ref, h2_acc, out_acc,
                         *, tk2, emb_p, h_resident):
    """Fused layer 2 + final einsum('rhc, rnh -> nc'):
         out[row_blk] = sum_r (rownorm(A2)[r, row_blk, :] @ h) @ W2[r] + b2
       grid = (row blocks, rp, K blocks over n).  h2 never touches HBM.
       h (when resident), W2f and b2 live whole in VMEM and are sliced in-kernel."""
    r, k = pl.program_id(1), pl.program_id(2)
    nr, nk = pl.num_programs(1), pl.num_programs(2)

    @pl.when(jnp.logical_and(r == 0, k == 0))
    def _():
        out_acc[...] = jnp.zeros_like(out_acc)

    @pl.when(k == 0)
    def _():
        h2_acc[...] = jnp.zeros_like(h2_acc)

    if h_resident:
        kk = pl.multiple_of(k * tk2, tk2)
        h_blk = h_ref[pl.ds(kk, tk2), :]
    else:
        h_blk = h_ref[...]
    h2_acc[...] += jnp.dot(a2_ref[...], h_blk, preferred_element_type=jnp.float32)

    @pl.when(k == nk - 1)
    def _():
        rr = pl.multiple_of(r * emb_p, emb_p)
        out_acc[...] += jnp.dot(h2_acc[...].astype(w2_ref.dtype),
                                w2_ref[pl.ds(rr, emb_p), :],
                                preferred_element_type=jnp.float32)

    @pl.when(jnp.logical_and(r == nr - 1, k == nk - 1))
    def _():
        o_ref[...] = (out_acc[...] + b2_ref[...]).astype(o_ref.dtype)


# --------------------------- forward pass ---------------------------

def lgcn_forward(params, buffers, dims, *, tm=512, tk=2048, tm2=512, tk2=2048,
                 tnt=2048):
    """Pallas LGCN forward.  tm/tk/tm2/tk2/tnt are tile-size *preferences*,
    clamped to legal divisors of the problem dims."""
    n, rp, emb, ncls, nt, r = (dims["n"], dims["rp"], dims["emb"],
                               dims["numcls"], dims["nt"], dims["r"])
    emb_p, ncls_p = _round_up(emb, _LANE), _round_up(ncls, _LANE)
    bf = jnp.bfloat16
    vmem_limit = _vmem_limit_bytes()

    hrows, hcols = buffers["hrows"], buffers["hcols"]
    vrows, vcols = buffers["vrows"], buffers["vcols"]

    # ----- latent softmaxes (both layers, one pallas_call, transposed / tiled over nt) -----
    nt_p = _round_up(nt, _LANE)
    tnt = _pick_tile(nt_p, tnt, _LANE)
    nhots_t = jnp.pad(buffers["nhots"].T, ((0, 0), (0, nt_p - nt))).astype(bf)  # (r, nt_p)
    wl1_t = params["Wl1"].T.astype(bf)                      # (rp, r)
    wl2_t = params["Wl2"].T.astype(bf)
    bl1_c = params["bl1"].reshape(rp, 1)
    bl2_c = params["bl2"].reshape(rp, 1)

    vmem_full = pl.BlockSpec(memory_space=pltpu.MemorySpace.VMEM)

    lat1_t, lat2_t = pl.pallas_call(
        _latent_softmax_kernel,
        out_shape=(jax.ShapeDtypeStruct((rp, nt_p), jnp.float32),
                   jax.ShapeDtypeStruct((rp, nt_p), jnp.float32)),
        grid_spec=pltpu.PrefetchScalarGridSpec(
            num_scalar_prefetch=0,
            grid=(nt_p // tnt,),
            in_specs=[pl.BlockSpec((r, tnt), lambda t: (0, t)),
                      vmem_full, vmem_full, vmem_full, vmem_full],
            out_specs=(pl.BlockSpec((rp, tnt), lambda t: (0, t)),
                       pl.BlockSpec((rp, tnt), lambda t: (0, t)))),
        compiler_params=pltpu.CompilerParams(
            dimension_semantics=("parallel",),
            vmem_limit_bytes=vmem_limit),
    )(nhots_t, wl1_t, bl1_c, wl2_t, bl2_c)

    # ----- pre-normalize sparse values (== util.sum_sparse) on O(rp*nt) values -----
    vals1 = lat1_t[:, :nt].reshape(-1)                       # k-major == latents.t().reshape(-1)
    colsum = jnp.zeros((n * rp,), jnp.float32).at[hcols].add(vals1)
    vals1 = vals1 / colsum[hcols]
    vals2 = lat2_t[:, :nt].reshape(-1)
    rowsum = jnp.zeros((n * rp,), jnp.float32).at[vrows].add(vals2)
    vals2 = vals2 / rowsum[vrows]

    # ----- densify the blown-up adjacencies as bf16 MXU operands -----
    # TODO(synk): COO->dense scatter-add stays in plain JAX (data-dependent scatter);
    # the scalable path is a gather/CSR spmm kernel with hrows/hcols prefetched into
    # SMEM via PrefetchScalarGridSpec so A1/A2 (O(n^2*rp)) are never materialized.
    A1 = (jnp.zeros((n, n * rp), jnp.float32)
          .at[hrows, hcols].add(vals1).astype(bf))           # (n, n*rp)
    A2 = (jnp.zeros((n * rp, n), jnp.float32)
          .at[vrows, vcols].add(vals2).astype(bf))           # (n*rp, n)

    # ----- lane-dense (last dim multiple of 128) weight / bias layouts -----
    W1f = _pad_last(params["W1"].reshape(rp * n, emb), emb_p).astype(bf)    # (rp*n, emb_p)
    b1 = _pad_last(params["b1"], emb_p)                                     # (1, emb_p) f32
    W2p = _pad_last(jnp.pad(params["W2"], ((0, 0), (0, emb_p - emb), (0, 0))), ncls_p)
    W2f = W2p.reshape(rp * emb_p, ncls_p).astype(bf)                        # (rp*emb_p, ncls_p)
    b2 = _pad_last(params["b2"], ncls_p)                                    # (1, ncls_p) f32

    # ----- tile selection (rows aligned to 16 for bf16 packing, even block count) -----
    tm = _pick_row_tile(n, tm, 16)
    tk = _pick_tile(n * rp, tk, _LANE)
    tm2 = _pick_row_tile(n, tm2, 16)
    tk2 = _pick_tile(n, tk2, _LANE)

    # ----- layer 1: h = relu(colnorm(A1) @ W1.view(rp*n, e) + b1) -----
    l1_resident_bytes = (rp * n * emb_p * 2          # W1f whole in VMEM
                         + 2 * tm * tk * 2           # A1 tile, double-buffered
                         + tm * emb_p * 4            # f32 accumulator
                         + 2 * tm * emb_p * 2        # out tile, double-buffered
                         + emb_p * 4)                # bias
    w1_resident = l1_resident_bytes < int(0.8 * vmem_limit)
    w1_spec = (vmem_full if w1_resident
               else pl.BlockSpec((tk, emb_p), lambda i, k: (k, 0)))

    h = pl.pallas_call(
        functools.partial(_mm_bias_relu_kernel, tk=tk, w_resident=w1_resident),
        out_shape=jax.ShapeDtypeStruct((n, emb_p), bf),
        grid_spec=pltpu.PrefetchScalarGridSpec(
            num_scalar_prefetch=0,
            grid=(n // tm, (n * rp) // tk),
            in_specs=[pl.BlockSpec((tm, tk), lambda i, k: (i, k)),   # A1 (streamed)
                      w1_spec,                                       # W1f (resident or streamed)
                      vmem_full],                                    # b1
            out_specs=pl.BlockSpec((tm, emb_p), lambda i, k: (i, 0)),
            scratch_shapes=[pltpu.VMEM((tm, emb_p), jnp.float32)]),
        compiler_params=pltpu.CompilerParams(
            dimension_semantics=("parallel", "arbitrary"),
            vmem_limit_bytes=vmem_limit),
    )(A1, W1f, b1)

    # ----- layer 2 fused with einsum('rhc, rnh -> nc') + bias -----
    nb = n // tm2
    l2_resident_bytes = (n * emb_p * 2               # h whole in VMEM
                         + rp * emb_p * ncls_p * 2   # W2f whole in VMEM
                         + 2 * tm2 * tk2 * 2         # A2 tile, double-buffered
                         + tm2 * emb_p * 4 + tm2 * ncls_p * 4   # scratch accumulators
                         + 2 * tm2 * ncls_p * 4      # out tile, double-buffered
                         + ncls_p * 4)               # bias
    h_resident = l2_resident_bytes < int(0.8 * vmem_limit)
    h_spec = (vmem_full if h_resident
              else pl.BlockSpec((tk2, emb_p), lambda i, rr, k: (k, 0)))

    out_p = pl.pallas_call(
        functools.partial(_layer2_fused_kernel, tk2=tk2, emb_p=emb_p,
                          h_resident=h_resident),
        out_shape=jax.ShapeDtypeStruct((n, ncls_p), jnp.float32),
        grid_spec=pltpu.PrefetchScalarGridSpec(
            num_scalar_prefetch=0,
            grid=(nb, rp, n // tk2),
            in_specs=[pl.BlockSpec((tm2, tk2),
                                   lambda i, rr, k: (rr * nb + i, k)),  # A2 (streamed)
                      h_spec,                                           # h
                      vmem_full,                                        # W2f (whole)
                      vmem_full],                                       # b2
            out_specs=pl.BlockSpec((tm2, ncls_p), lambda i, rr, k: (i, 0)),
            scratch_shapes=[pltpu.VMEM((tm2, emb_p), jnp.float32),
                            pltpu.VMEM((tm2, ncls_p), jnp.float32)]),
        compiler_params=pltpu.CompilerParams(
            dimension_semantics=("parallel", "arbitrary", "arbitrary"),
            vmem_limit_bytes=vmem_limit),
    )(A2, h, W2f, b2)

    return out_p[:, :ncls]                                              # (n, numcls)


# --------------------------- plain-JAX reference ---------------------------

def lgcn_reference(params, buffers, dims):
    """Plain-JAX mirror of the torch module's forward (sum_sparse / spmm semantics),
    with the same bf16-operand / f32-accumulation precision the kernels use."""
    n, rp, emb, nt = dims["n"], dims["rp"], dims["emb"], dims["nt"]
    bf = jnp.bfloat16
    nhots = buffers["nhots"]
    hrows, hcols = buffers["hrows"], buffers["hcols"]
    vrows, vcols = buffers["vrows"], buffers["vcols"]

    lat1 = jax.nn.softmax(
        jnp.dot(nhots.astype(bf), params["Wl1"].astype(bf),
                preferred_element_type=jnp.float32) + params["bl1"][0], axis=1)
    vals1 = lat1.T.reshape(-1)
    colsum = jnp.zeros((n * rp,), jnp.float32).at[hcols].add(vals1)
    vals1 = vals1 / colsum[hcols]
    A1 = jnp.zeros((n, n * rp), jnp.float32).at[hrows, hcols].add(vals1).astype(bf)
    W1f = params["W1"].reshape(rp * n, emb).astype(bf)
    h = jnp.dot(A1, W1f, preferred_element_type=jnp.float32)
    h = jax.nn.relu(h + params["b1"][0]).astype(bf)

    lat2 = jax.nn.softmax(
        jnp.dot(nhots.astype(bf), params["Wl2"].astype(bf),
                preferred_element_type=jnp.float32) + params["bl2"][0], axis=1)
    vals2 = lat2.T.reshape(-1)
    rowsum = jnp.zeros((n * rp,), jnp.float32).at[vrows].add(vals2)
    vals2 = vals2 / rowsum[vrows]
    A2 = jnp.zeros((n * rp, n), jnp.float32).at[vrows, vcols].add(vals2).astype(bf)
    h2 = jnp.dot(A2, h, preferred_element_type=jnp.float32)            # (n*rp, emb)
    H = h2.reshape(rp, n, emb).astype(bf)
    out = jnp.einsum("rhc,rnh->nc", params["W2"].astype(bf), H,
                     preferred_element_type=jnp.float32)
    return out + params["b2"][0]


# --------------------------- graph / parameter construction ---------------------------

def build_buffers(triples, n, r, rp):
    indices = sorted({(s, o) for s, _, o in triples})
    p2i = {(s, o): i for i, (s, o) in enumerate(indices)}
    nt = len(indices)
    s_list = [so[0] for so in indices]
    o_list = [so[1] for so in indices]

    # NOTE: hcols = o*k / vrows = s*k reproduces the original module's
    # (s * rm) / (o * rm) construction verbatim (k=0 entries collide by design there).
    hrows, hcols, vrows, vcols = [], [], [], []
    for k in range(rp):                       # k-major / t-minor, matches latents.t().reshape(-1)
        for t in range(nt):
            hrows.append(s_list[t]);      hcols.append(o_list[t] * k)
            vrows.append(s_list[t] * k);  vcols.append(o_list[t])

    nhots = [[0.0] * r for _ in range(nt)]
    for (ss, pp, oo) in triples:
        nhots[p2i[(ss, oo)]][pp] = 1.0

    return dict(
        nhots=jnp.array(nhots, jnp.float32),
        hrows=jnp.array(hrows, jnp.int32), hcols=jnp.array(hcols, jnp.int32),
        vrows=jnp.array(vrows, jnp.int32), vcols=jnp.array(vcols, jnp.int32),
    ), nt


def _xavier(key, shape, gain=math.sqrt(2.0)):
    fan_in, fan_out = shape[-2], shape[-1]
    limit = gain * math.sqrt(6.0 / (fan_in + fan_out))
    return jax.random.uniform(key, shape, jnp.float32, -limit, limit)


if __name__ == "__main__":
    # small shapes consistent with the module (but big enough that the grids
    # actually have multiple row- and K-blocks): n nodes, r relations, rp latent
    # relations, emb hidden size, numcls output classes.
    n, r, rp, emb, numcls = 256, 8, 8, 16, 8
    num_triples = 512

    # deterministic synthetic triples: 512 distinct (s, o) pairs, all predicates used.
    triples = []
    for i in range(num_triples):
        s = i % n
        o = ((i // n) + 5 * i) % n
        p = i % r
        triples.append((s, p, o))

    buffers, nt = build_buffers(triples, n, r, rp)
    dims = dict(n=n, r=r, rp=rp, emb=emb, numcls=numcls, nt=nt)

    key = jax.random.PRNGKey(0)
    ks = jax.random.split(key, 4)
    params = dict(
        Wl1=_xavier(ks[0], (r, rp), gain=1.0),           # to_latent1: Linear(r, rp)
        bl1=jnp.zeros((1, rp), jnp.float32),
        Wl2=_xavier(ks[1], (r, rp), gain=1.0),           # to_latent2: Linear(r, rp)
        bl2=jnp.zeros((1, rp), jnp.float32),
        W1=_xavier(ks[2], (rp, n, emb)),                 # weights1
        W2=_xavier(ks[3], (rp, emb, numcls)),            # weights2
        b1=jnp.zeros((1, emb), jnp.float32),             # bias1
        b2=jnp.zeros((1, numcls), jnp.float32),          # bias2
    )

    # small tile preferences so the toy problem still exercises multi-step grids
    # (row blocks + K-block accumulation); production sizes use the defaults.
    out = jax.block_until_ready(
        lgcn_forward(params, buffers, dims, tm=128, tk=1024, tm2=128, tk2=128, tnt=256))
    ref = jax.block_until_ready(lgcn_reference(params, buffers, dims))

    assert out.shape == (n, numcls), out.shape
    if not bool(jnp.allclose(out, ref, atol=5e-3, rtol=5e-3)):
        err = float(jnp.max(jnp.abs(out - ref)))
        raise AssertionError(f"Pallas LGCN output does not match reference (max |diff|={err})")
    print("KERNEL_OK")
</pallas_src>

<mosaic_0001>
module attributes {stable_mosaic.version = 11 : i64} {
  func.func @_latent_softmax_kernel(%arg0: i32, %arg1: memref<8x256xbf16, #tpu.memory_space<vmem>>, %arg2: memref<8x8xbf16, #tpu.memory_space<vmem>>, %arg3: memref<8x1xf32, #tpu.memory_space<vmem>>, %arg4: memref<8x8xbf16, #tpu.memory_space<vmem>>, %arg5: memref<8x1xf32, #tpu.memory_space<vmem>>, %arg6: memref<8x256xf32, #tpu.memory_space<vmem>>, %arg7: memref<8x256xf32, #tpu.memory_space<vmem>>) attributes {dimension_semantics = [#tpu.dimension_semantics<parallel>], iteration_bounds = array<i64: 2>, scalar_prefetch = 0 : i64, scratch_operands = 0 : i64, tpu.core_type = #tpu.core_type<tc>, window_params = [{transform_indices = @transform_0, window_bounds = array<i64: 8, 256>}, {pipeline_mode = #tpu.pipeline_mode<synchronous>, transform_indices = @transform_1, window_bounds = array<i64: 8, 8>}, {pipeline_mode = #tpu.pipeline_mode<synchronous>, transform_indices = @transform_2, window_bounds = array<i64: 8, 1>}, {pipeline_mode = #tpu.pipeline_mode<synchronous>, transform_indices = @transform_3, window_bounds = array<i64: 8, 8>}, {pipeline_mode = #tpu.pipeline_mode<synchronous>, transform_indices = @transform_4, window_bounds = array<i64: 8, 1>}, {transform_indices = @transform_5, window_bounds = array<i64: 8, 256>}, {transform_indices = @transform_6, window_bounds = array<i64: 8, 256>}]} {
    %c0 = arith.constant 0 : index
    %c0_0 = arith.constant 0 : index
    %0 = vector.load %arg1[%c0, %c0_0] : memref<8x256xbf16, #tpu.memory_space<vmem>>, vector<8x256xbf16>
    %c0_1 = arith.constant 0 : index
    %c0_2 = arith.constant 0 : index
    %1 = vector.load %arg2[%c0_1, %c0_2] : memref<8x8xbf16, #tpu.memory_space<vmem>>, vector<8x8xbf16>
    %c0_3 = arith.constant 0 : index
    %c0_4 = arith.constant 0 : index
    %2 = vector.load %arg3[%c0_3, %c0_4] : memref<8x1xf32, #tpu.memory_space<vmem>>, vector<8x1xf32>
    %cst = arith.constant dense<0.000000e+00> : vector<8x256xf32>
    %3 = tpu.matmul %1, %0, %cst {dimension_numbers = #tpu.dot_dimension_numbers<[1], [0], [0], [1], [0, 0, 1, 1], [], []>} : vector<8x8xbf16>, vector<8x256xbf16>, vector<8x256xf32> -> vector<8x256xf32>
    %4 = vector.broadcast %2 : vector<8x1xf32> to vector<8x256xf32>
    %5 = arith.addf %3, %4 : vector<8x256xf32>
    %cst_5 = arith.constant dense<0xFF800000> : vector<256xf32>
    %6 = vector.multi_reduction <maximumf>, %5, %cst_5 [0] : vector<8x256xf32> to vector<256xf32>
    %7 = vector.shape_cast %6 : vector<256xf32> to vector<1x256xf32>
    %8 = vector.broadcast %7 : vector<1x256xf32> to vector<8x256xf32>
    %9 = arith.subf %5, %8 : vector<8x256xf32>
    %10 = math.exp %9 : vector<8x256xf32>
    %cst_6 = arith.constant dense<0.000000e+00> : vector<256xf32>
    %11 = vector.multi_reduction <add>, %10, %cst_6 [0] : vector<8x256xf32> to vector<256xf32>
    %12 = vector.shape_cast %11 : vector<256xf32> to vector<1x256xf32>
    %13 = vector.broadcast %12 : vector<1x256xf32> to vector<8x256xf32>
    %14 = arith.divf %10, %13 : vector<8x256xf32>
    %c0_7 = arith.constant 0 : index
    %c0_8 = arith.constant 0 : index
    %15 = vector.load %arg6[%c0_7, %c0_8] : memref<8x256xf32, #tpu.memory_space<vmem>>, vector<8x256xf32>
    tpu.vector_store %arg6[%c0_7, %c0_8], %14 {strides = array<i32>} : memref<8x256xf32, #tpu.memory_space<vmem>>, vector<8x256xf32>,
    %c0_9 = arith.constant 0 : index
    %c0_10 = arith.constant 0 : index
    %16 = vector.load %arg4[%c0_9, %c0_10] : memref<8x8xbf16, #tpu.memory_space<vmem>>, vector<8x8xbf16>
    %c0_11 = arith.constant 0 : index
    %c0_12 = arith.constant 0 : index
    %17 = vector.load %arg5[%c0_11, %c0_12] : memref<8x1xf32, #tpu.memory_space<vmem>>, vector<8x1xf32>
    %cst_13 = arith.constant dense<0.000000e+00> : vector<8x256xf32>
    %18 = tpu.matmul %16, %0, %cst_13 {dimension_numbers = #tpu.dot_dimension_numbers<[1], [0], [0], [1], [0, 0, 1, 1], [], []>} : vector<8x8xbf16>, vector<8x256xbf16>, vector<8x256xf32> -> vector<8x256xf32>
    %19 = vector.broadcast %17 : vector<8x1xf32> to vector<8x256xf32>
    %20 = arith.addf %18, %19 : vector<8x256xf32>
    %cst_14 = arith.constant dense<0xFF800000> : vector<256xf32>
    %21 = vector.multi_reduction <maximumf>, %20, %cst_14 [0] : vector<8x256xf32> to vector<256xf32>
    %22 = vector.shape_cast %21 : vector<256xf32> to vector<1x256xf32>
    %23 = vector.broadcast %22 : vector<1x256xf32> to vector<8x256xf32>
    %24 = arith.subf %20, %23 : vector<8x256xf32>
    %25 = math.exp %24 : vector<8x256xf32>
    %cst_15 = arith.constant dense<0.000000e+00> : vector<256xf32>
    %26 = vector.multi_reduction <add>, %25, %cst_15 [0] : vector<8x256xf32> to vector<256xf32>
    %27 = vector.shape_cast %26 : vector<256xf32> to vector<1x256xf32>
    %28 = vector.broadcast %27 : vector<1x256xf32> to vector<8x256xf32>
    %29 = arith.divf %25, %28 : vector<8x256xf32>
    %c0_16 = arith.constant 0 : index
    %c0_17 = arith.constant 0 : index
    %30 = vector.load %arg7[%c0_16, %c0_17] : memref<8x256xf32, #tpu.memory_space<vmem>>, vector<8x256xf32>
    tpu.vector_store %arg7[%c0_16, %c0_17], %29 {strides = array<i32>} : memref<8x256xf32, #tpu.memory_space<vmem>>, vector<8x256xf32>,
    return
  }
  func.func @transform_0(%arg0: i32) -> (i32, i32) {
    %c0_i32 = arith.constant 0 : i32
    %c0_i32_0 = arith.constant 0 : i32
    return %c0_i32, %arg0 : i32, i32
  }
  func.func @transform_1(%arg0: i32) -> (i32, i32) {
    %c0_i32 = arith.constant 0 : i32
    %c0_i32_0 = arith.constant 0 : i32
    %c0_i32_1 = arith.constant 0 : i32
    return %c0_i32, %c0_i32_0 : i32, i32
  }
  func.func @transform_2(%arg0: i32) -> (i32, i32) {
    %c0_i32 = arith.constant 0 : i32
    %c0_i32_0 = arith.constant 0 : i32
    %c0_i32_1 = arith.constant 0 : i32
    return %c0_i32, %c0_i32_0 : i32, i32
  }
  func.func @transform_3(%arg0: i32) -> (i32, i32) {
    %c0_i32 = arith.constant 0 : i32
    %c0_i32_0 = arith.constant 0 : i32
    %c0_i32_1 = arith.constant 0 : i32
    return %c0_i32, %c0_i32_0 : i32, i32
  }
  func.func @transform_4(%arg0: i32) -> (i32, i32) {
    %c0_i32 = arith.constant 0 : i32
    %c0_i32_0 = arith.constant 0 : i32
    %c0_i32_1 = arith.constant 0 : i32
    return %c0_i32, %c0_i32_0 : i32, i32
  }
  func.func @transform_5(%arg0: i32) -> (i32, i32) {
    %c0_i32 = arith.constant 0 : i32
    %c0_i32_0 = arith.constant 0 : i32
    return %c0_i32, %arg0 : i32, i32
  }
  func.func @transform_6(%arg0: i32) -> (i32, i32) {
    %c0_i32 = arith.constant 0 : i32
    %c0_i32_0 = arith.constant 0 : i32
    return %c0_i32, %arg0 : i32, i32
  }
}

</mosaic_0001>

<llo_original>
// kernel: tpu_custom_call.1
$region0: #{tpu_custom_call.1}
  #allocation0 [shape = 'u32[]', space=smem, size = 0x4, offset = 0x4, fixed_abs, tag = 'smem constant byte address 0x4 - core index']
  #allocation1 [shape = 'u32[144,128]{1,0:T(1,128)}', space=vmem, size = 0x12000, scoped, tag = 'internal scratch']
  %s0 = inlined_call_operand.vmem [shape: bf16[8,512], index: 0, kind: input, shape index: {}]
  %s1 = inlined_call_operand.hbm [shape: bf16[8,8], index: 1, kind: input, shape index: {}]
  %s2 = inlined_call_operand.vmem [shape: f32[8,1], index: 2, kind: input, shape index: {}]
  %s3 = inlined_call_operand.vmem [shape: bf16[8,8], index: 3, kind: input, shape index: {}]
  %s4 = inlined_call_operand.vmem [shape: f32[8,1], index: 4, kind: input, shape index: {}]
  %s5 = inlined_call_operand.hbm [shape: f32[8,512], index: 5, kind: output, shape index: {0}]
  %s6 = inlined_call_operand.hbm [shape: f32[8,512], index: 6, kind: output, shape index: {1}]
  %7 = xla_tuple %s5, %s6
  %s8 = sld [smem:[#allocation0]]
  $region65: #{tpu_custom_call.1} parent=0
    _
  %s10 = ssub.s32 1, %s8
  %s11 = scalar_select 0, %s10, %s8
  $region1: #{tpu_custom_call.1} parent=0
    #allocation2 [shape = 'u8[2048]{0}', space=vmem, size = 0x800, scoped, tag = 'input window, operand 1, single buffered']
    #allocation3 [shape = 's32[2]{0}', space=sflag, size = 0x8, scoped, tag = 'scoped memory for tpu_custom_call.1']
    #allocation4 [shape = 's32[2]{0}', space=sflag, size = 0x8, scoped, tag = 'scoped memory for tpu_custom_call.1']
    #allocation5 [shape = 'u8[16384]{0}', space=vmem, size = 0x4000, scoped, tag = 'output window, operand 0']
    #allocation6 [shape = 'u8[16384]{0}', space=vmem, size = 0x4000, scoped, tag = 'output window, operand 1']
    #allocation7 [shape = 's32[2]{0}', space=sflag, size = 0x8, scoped, tag = 'scoped memory for tpu_custom_call.1']
    %12 = vsyncpa [#allocation3], 0
    %13 = vsyncpa [#allocation4], 0
    %s14 = scalar_lea.sflag [#allocation4], 1
    %15 = vsyncpa %s14, 0
    %16 = vsyncpa [#allocation7], 0
    %s17 = scalar_lea.sflag [#allocation7], 1
    %18 = vsyncpa %s17, 0
    loop: start=0, step=1, limit=4
    $region2: #{tpu_custom_call.1} parent=1 // loop_pre_header
      _
    $region3: #{tpu_custom_call.1} parent=1 // loop_header
      %s20 = sphi 0, %s24
      %p21 = scmp.ge.s32.totalorder %s20, 4
      %s30 = sphi 0, %s32
      %s33 = sphi 0, %s30
      %s34 = sphi 0, %s33
      %s50 = sphi 0, %s34
      %s54 = sphi 0, %s54
      %s56 = sphi 0, %s54
      %s57 = sphi 0, %s56
      %s71 = sphi 0, %s57
      %s75 = sphi 0, %s75
      %s77 = sphi 0, %s75
      %s78 = sphi 0, %s77
      %s92 = sphi 0, %s78
      %s96 = sphi 0, %s96
      %s98 = sphi 0, %s96
      %s99 = sphi 0, %s98
      %s113 = sphi 0, %s99
      %s117 = sphi 0, %s117
      %s119 = sphi 0, %s117
      %s120 = sphi 0, %s119
      %s134 = sphi 0, %s120
      %s140 = sphi 0, %s142
      %s143 = sphi 0, %s140
      %s144 = sphi 0, %s143
      %s160 = sphi 0, %s144
      %s166 = sphi 0, %s168
      %s169 = sphi 0, %s166
      %s170 = sphi 0, %s169
      %s186 = sphi 0, %s170
    $region4: #{tpu_custom_call.1} parent=1 // loop_header_branch
      %23 = sbr.rel (%p21) target = $region8
    $region5: #{tpu_custom_call.1} parent=1 // loop_body
      %s25 = ssub.s32 %s20, 1
      %s26 = ssub.s32 %s20, 2
      %s27 = sadd.s32 %s20, 1
      %s28 = ssub.s32 %s20, %s27
      %p29 = scmp.eq.s32.totalorder %s28, 0
      %s31 = sadd.s32 %s30, 1
      %s32 = scalar_select %p29, %s30, %s31
      %p35 = pneg %p29
      %p36 = scmp.eq.s32.totalorder %s20, 1
      %p37 = por %p35, %p36
      %p38 = scmp.ne.s32.totalorder %s30, %s33
      %p39 = scmp.eq.s32.totalorder %s20, 0
      %p40 = por %p38, %p39
      %p41 = scmp.ne.s32.totalorder %s30, %s33
      %p42 = scmp.eq.s32.totalorder %s25, 1
      %p43 = por %p41, %p42
      %p44 = scmp.ne.s32.totalorder %s33, %s34
      %p45 = scmp.eq.s32.totalorder %s25, 0
      %p46 = por %p44, %p45
      %p47 = scmp.ne.s32.totalorder %s33, %s34
      %p48 = scmp.eq.s32.totalorder %s26, 1
      %p49 = por %p47, %p48
      %p51 = scmp.ne.s32.totalorder %s34, %s50
      %p52 = scmp.eq.s32.totalorder %s26, 0
      %p53 = por %p51, %p52
      %s55 = sadd.s32 %s54, 1
      %p58 = scmp.eq.s32.totalorder %s20, 1
      %p59 = scmp.ne.s32.totalorder %s54, %s56
      %p60 = scmp.eq.s32.totalorder %s20, 0
      %p61 = por %p59, %p60
      %p62 = scmp.ne.s32.totalorder %s54, %s56
      %p63 = scmp.eq.s32.totalorder %s25, 1
      %p64 = por %p62, %p63
      %p65 = scmp.ne.s32.totalorder %s56, %s57
      %p66 = scmp.eq.s32.totalorder %s25, 0
      %p67 = por %p65, %p66
      %p68 = scmp.ne.s32.totalorder %s56, %s57
      %p69 = scmp.eq.s32.totalorder %s26, 1
      %p70 = por %p68, %p69
      %p72 = scmp.ne.s32.totalorder %s57, %s71
      %p73 = scmp.eq.s32.totalorder %s26, 0
      %p74 = por %p72, %p73
      %s76 = sadd.s32 %s75, 1
      %p79 = scmp.eq.s32.totalorder %s20, 1
      %p80 = scmp.ne.s32.totalorder %s75, %s77
      %p81 = scmp.eq.s32.totalorder %s20, 0
      %p82 = por %p80, %p81
      %p83 = scmp.ne.s32.totalorder %s75, %s77
      %p84 = scmp.eq.s32.totalorder %s25, 1
      %p85 = por %p83, %p84
      %p86 = scmp.ne.s32.totalorder %s77, %s78
      %p87 = scmp.eq.s32.totalorder %s25, 0
      %p88 = por %p86, %p87
      %p89 = scmp.ne.s32.totalorder %s77, %s78
      %p90 = scmp.eq.s32.totalorder %s26, 1
      %p91 = por %p89, %p90
      %p93 = scmp.ne.s32.totalorder %s78, %s92
      %p94 = scmp.eq.s32.totalorder %s26, 0
      %p95 = por %p93, %p94
      %s97 = sadd.s32 %s96, 1
      %p100 = scmp.eq.s32.totalorder %s20, 1
      %p101 = scmp.ne.s32.totalorder %s96, %s98
      %p102 = scmp.eq.s32.totalorder %s20, 0
      %p103 = por %p101, %p102
      %p104 = scmp.ne.s32.totalorder %s96, %s98
      %p105 = scmp.eq.s32.totalorder %s25, 1
      %p106 = por %p104, %p105
      %p107 = scmp.ne.s32.totalorder %s98, %s99
      %p108 = scmp.eq.s32.totalorder %s25, 0
      %p109 = por %p107, %p108
      %p110 = scmp.ne.s32.totalorder %s98, %s99
      %p111 = scmp.eq.s32.totalorder %s26, 1
      %p112 = por %p110, %p111
      %p114 = scmp.ne.s32.totalorder %s99, %s113
      %p115 = scmp.eq.s32.totalorder %s26, 0
      %p116 = por %p114, %p115
      %s118 = sadd.s32 %s117, 1
      %p121 = scmp.eq.s32.totalorder %s20, 1
      %p122 = scmp.ne.s32.totalorder %s117, %s119
      %p123 = scmp.eq.s32.totalorder %s20, 0
      %p124 = por %p122, %p123
      %p125 = scmp.ne.s32.totalorder %s117, %s119
      %p126 = scmp.eq.s32.totalorder %s25, 1
      %p127 = por %p125, %p126
      %p128 = scmp.ne.s32.totalorder %s119, %s120
      %p129 = scmp.eq.s32.totalorder %s25, 0
      %p130 = por %p128, %p129
      %p131 = scmp.ne.s32.totalorder %s119, %s120
      %p132 = scmp.eq.s32.totalorder %s26, 1
      %p133 = por %p131, %p132
      %p135 = scmp.ne.s32.totalorder %s120, %s134
      %p136 = scmp.eq.s32.totalorder %s26, 0
      %p137 = por %p135, %p136
      %s138 = ssub.s32 %s20, %s27
      %p139 = scmp.eq.s32.totalorder %s138, 0
      %s141 = sadd.s32 %s140, 1
      %s142 = scalar_select %p139, %s140, %s141
      %p145 = pneg %p139
      %p146 = scmp.eq.s32.totalorder %s20, 1
      %p147 = por %p145, %p146
      %p148 = scmp.ne.s32.totalorder %s140, %s143
      %p149 = scmp.eq.s32.totalorder %s20, 0
      %p150 = por %p148, %p149
      %p151 = scmp.ne.s32.totalorder %s140, %s143
      %p152 = scmp.eq.s32.totalorder %s25, 1
      %p153 = por %p151, %p152
      %p154 = scmp.ne.s32.totalorder %s143, %s144
      %p155 = scmp.eq.s32.totalorder %s25, 0
      %p156 = por %p154, %p155
      %p157 = scmp.ne.s32.totalorder %s143, %s144
      %p158 = scmp.eq.s32.totalorder %s26, 1
      %p159 = por %p157, %p158
      %p161 = scmp.ne.s32.totalorder %s144, %s160
      %p162 = scmp.eq.s32.totalorder %s26, 0
      %p163 = por %p161, %p162
      %s164 = ssub.s32 %s20, %s27
      %p165 = scmp.eq.s32.totalorder %s164, 0
      %s167 = sadd.s32 %s166, 1
      %s168 = scalar_select %p165, %s166, %s167
      %p171 = pneg %p165
      %p172 = scmp.eq.s32.totalorder %s20, 1
      %p173 = por %p171, %p172
      %p174 = scmp.ne.s32.totalorder %s166, %s169
      %p175 = scmp.eq.s32.totalorder %s20, 0
      %p176 = por %p174, %p175
      %p177 = scmp.ne.s32.totalorder %s166, %s169
      %p178 = scmp.eq.s32.totalorder %s25, 1
      %p179 = por %p177, %p178
      %p180 = scmp.ne.s32.totalorder %s169, %s170
      %p181 = scmp.eq.s32.totalorder %s25, 0
      %p182 = por %p180, %p181
      %p183 = scmp.ne.s32.totalorder %s169, %s170
      %p184 = scmp.eq.s32.totalorder %s26, 1
      %p185 = por %p183, %p184
      %p187 = scmp.ne.s32.totalorder %s170, %s186
      %p188 = scmp.eq.s32.totalorder %s26, 0
      %p189 = por %p187, %p188
      %p190 = scmp.le.s32.totalorder 1, %s20
      %p191 = scmp.lt.s32.totalorder %s20, 3
      %p192 = pnand %p190, %p191
      %p193 = pneg %p192
      // Predicated region
      $region9: #{tpu_custom_call.1} parent=5 // pred_check
        _
      $region10: #{tpu_custom_call.1} parent=5 // pred_check_branch
        %195 = sbr.rel (%p192) target = $region12
      $region11: #{tpu_custom_call.1} parent=5 // pred_region
        %s196 = ssub.s32 %s20, 1
        // Predicated region
        $region13: #{tpu_custom_call.1} parent=11 // pred_check
          %p197 = pneg %p67
        $region14: #{tpu_custom_call.1} parent=11 // pred_check_branch
          %199 = sbr.rel (%p197) target = $region16
        $region15: #{tpu_custom_call.1} parent=11 // pred_region
          %s201 = ssub.s32 64, 64
          %202 = vsyncadd [#allocation3], %s201
          %s204 = sshll.u32 [#allocation2], 4
          %s205 = int_to_ptr.vmem [resolvable:$true] %s204
          %207 = dma.hbm_to_vmem [thread:$0]  %s1, 64, %s205, [#allocation3]
        $region16: #{tpu_custom_call.1} parent=11 // pred_fallthru
          _
        // Predicated region
        $region17: #{tpu_custom_call.1} parent=11 // pred_check
          %p208 = pneg %p88
        $region18: #{tpu_custom_call.1} parent=11 // pred_check_branch
          %210 = sbr.rel (%p208) target = $region20
        $region19: #{tpu_custom_call.1} parent=11 // pred_region
          _
        $region20: #{tpu_custom_call.1} parent=11 // pred_fallthru
          _
        // Predicated region
        $region21: #{tpu_custom_call.1} parent=11 // pred_check
          %p211 = pneg %p109
        $region22: #{tpu_custom_call.1} parent=11 // pred_check_branch
          %213 = sbr.rel (%p211) target = $region24
        $region23: #{tpu_custom_call.1} parent=11 // pred_region
          _
        $region24: #{tpu_custom_call.1} parent=11 // pred_fallthru
          _
        // Predicated region
        $region25: #{tpu_custom_call.1} parent=11 // pred_check
          %p214 = pneg %p130
        $region26: #{tpu_custom_call.1} parent=11 // pred_check_branch
          %216 = sbr.rel (%p214) target = $region28
        $region27: #{tpu_custom_call.1} parent=11 // pred_region
          _
        $region28: #{tpu_custom_call.1} parent=11 // pred_fallthru
          _
      $region12: #{tpu_custom_call.1} parent=5 // pred_fallthru
        _
      %p217 = scmp.lt.s32.totalorder %s20, 2
      // Predicated region
      $region29: #{tpu_custom_call.1} parent=5 // pred_check
        %p218 = pneg %p217
      $region30: #{tpu_custom_call.1} parent=5 // pred_check_branch
        %220 = sbr.rel (%p218) target = $region32
      $region31: #{tpu_custom_call.1} parent=5 // pred_region
        // Predicated region
        $region33: #{tpu_custom_call.1} parent=31 // pred_check
          %p221 = pneg %p40
        $region34: #{tpu_custom_call.1} parent=31 // pred_check_branch
          %223 = sbr.rel (%p221) target = $region36
        $region35: #{tpu_custom_call.1} parent=31 // pred_region
          %s224 = smul.u32 2, %s20
          %p225 = scmp.lt.s32.totalorder %s224, 3
          %s226 = scalar_select %p225, %s224, 3
          %s227 = smul.addr %s226, 4
          %s228 = scalar_lea.vmem %s0, %s227
          %s229 = smul.u32 2, %s20
        $region36: #{tpu_custom_call.1} parent=31 // pred_fallthru
          _
      $region32: #{tpu_custom_call.1} parent=5 // pred_fallthru
        _
      %p230 = scmp.le.s32.totalorder 1, %s20
      %p231 = scmp.lt.s32.totalorder %s20, 3
      %p232 = pnand %p230, %p231
      %p233 = pneg %p232
      // Predicated region
      $region37: #{tpu_custom_call.1} parent=5 // pred_check
        _
      $region38: #{tpu_custom_call.1} parent=5 // pred_check_branch
        %235 = sbr.rel (%p232) target = $region40
      $region39: #{tpu_custom_call.1} parent=5 // pred_region
        %s236 = ssub.s32 %s20, 1
        // Predicated region
        $region41: #{tpu_custom_call.1} parent=39 // pred_check
          %p237 = pneg %p67
        $region42: #{tpu_custom_call.1} parent=39 // pred_check_branch
          %239 = sbr.rel (%p237) target = $region44
        $region43: #{tpu_custom_call.1} parent=39 // pred_region
          %240 = dma.done [#allocation3], 64
        $region44: #{tpu_custom_call.1} parent=39 // pred_fallthru
          _
        %s241 = smul.u32 2, %s25
        %p242 = scmp.lt.s32.totalorder %s241, 3
        %s243 = scalar_select %p242, %s241, 3
        %s244 = smul.addr %s243, 4
        %s245 = scalar_lea.vmem %s0, %s244
        %p246 = pneg %p46
        %p247 = pneg %p43
        %p248 = pneg %p67
        %p249 = pneg %p64
        %p250 = pneg %p88
        %p251 = pneg %p85
        %p252 = pneg %p109
        %p253 = pneg %p106
        %p254 = pneg %p130
        %p255 = pneg %p127
        %p256 = pneg %p156
        %p257 = pneg %p153
        %s258 = sand.u32 %s143, 1
        %s259 = scalar_lea.sflag [#allocation4], %s258
        %s260 = sand.u32 %s143, 1
        %s261 = smul.addr %s260, 16
        %s262 = scalar_lea.vmem [#allocation5], %s261
        %p263 = pneg %p182
        %p264 = pneg %p179
        %s265 = sand.u32 %s169, 1
        %s266 = scalar_lea.sflag [#allocation7], %s265
        %s267 = sand.u32 %s169, 1
        %s268 = smul.addr %s267, 16
        %s269 = scalar_lea.vmem [#allocation6], %s268
        %s270 = smul.u32 2, %s25
        %p271 = scmp.lt.s32.totalorder %s270, 3
        %s272 = scalar_select %p271, %s270, 3
        %s273 = smul.addr %s272, 4
        %s274 = scalar_lea.vmem %s0, %s273
        %s275 = smul.u32 2, %s25
        %s276 = smul.u32 2, %s25
        %s277 = smul.u32 2, %s25
        %v279 = vld [vmem:[%s274] sm:$0xff]
        %v280 = vld [vmem:[#allocation2] sm:$0xf]
        %v281 = vld [vmem:[%s2] sm:$0xff]
        %283 = vset.pattern.permute.xlu0 0
        %284 = vperm.xlu0 %283, %v281
        %v285 = vpop.permute.xlu0 %284
        %v288 = vunpack.c.l.b16 %v279
        %v289 = vunpack.c.h.b16 %v279
        %v290 = vpack.c.b16 %v288, %v288
        %v291 = vpack.c.b16 %v289, %v289
        %vm292 = vcmask 64512
        %v294 = vsel %vm292, %v280, 0
        %vm296 = vcmask 1043456
        %v298 = vsel %vm296, %v290, 0
        %v301 = vsel %vm296, %v291, 0
        %303 = vmatprep.subr.bf16.mxu0 0
        %304 = vmatpush1.bf16.msra.mxu0 0
        %305 = vmatprep.subr.bf16.mxu0 0
        %306 = vmatpush1.bf16.msra.mxu0 0
        %307 = vmatprep.subr.bf16.mxu0 0
        %308 = vmatpush1.bf16.msra.mxu0 0
        %309 = vmatprep.subr.bf16.mxu0 0
        %310 = vmatpush1.bf16.msra.mxu0 0
        %311 = vmatprep.subr.bf16.mxu0 0
        %312 = vmatpush1.bf16.msra.mxu0 0
        %313 = vmatprep.subr.bf16.mxu0 0
        %314 = vmatpush1.bf16.msra.mxu0 0
        %315 = vmatprep.subr.bf16.mxu0 0
        %316 = vmatpush1.bf16.msra.mxu0 0
        %317 = vmatprep.subr.bf16.mxu0 %v301
        %318 = vmatpush1.bf16.msra.mxu0 %v298
        %319 = vmatprep.subr.bf16.mxu0 0
        %320 = vmatpush2.bf16.msra.mxu0 0
        %321 = vmatprep.subr.bf16.mxu0 0
        %322 = vmatpush2.bf16.msra.mxu0 0
        %323 = vmatprep.subr.bf16.mxu0 0
        %324 = vmatpush2.bf16.msra.mxu0 0
        %325 = vmatprep.subr.bf16.mxu0 0
        %326 = vmatpush2.bf16.msra.mxu0 0
        %327 = vmatprep.subr.bf16.mxu0 0
        %328 = vmatpush2.bf16.msra.mxu0 0
        %329 = vmatprep.subr.bf16.mxu0 0
        %330 = vmatpush2.bf16.msra.mxu0 0
        %331 = vmatprep.subr.bf16.mxu0 0
        %332 = vmatpush2.bf16.msra.mxu0 0
        %333 = vmatprep.subr.bf16.mxu0 0
        %334 = vmatpush2.bf16.msra.mxu0 0
        %335 = vmatprep.mubr.bf16.mxu0 0
        %336 = vmatmul.mubr.bf16.gmra.mxu0 %v294
        %v337 = vpop.f32.mrf.mxu0
        %v338 = vadd.f32 %v285, %v337
        %v339 = vpop.f32.mrf.mxu0
        %v340 = vadd.f32 %v285, %v339
        %v341 = vpop.f32.mrf.mxu0
        %v342 = vpop.f32.mrf.mxu0
        %343 = vdwg.mxu0
        %v344 = vrot.slane %v338, 4
        %v345 = vmax.f32 %v338, %v344
        %v346 = vrot.slane %v345, 2
        %v347 = vmax.f32 %v345, %v346
        %v348 = vrot.slane %v347, 1
        %v349 = vmax.f32 %v347, %v348
        %v350 = vrot.slane %v340, 4
        %v351 = vmax.f32 %v340, %v350
        %v352 = vrot.slane %v351, 2
        %v353 = vmax.f32 %v351, %v352
        %v354 = vrot.slane %v353, 1
        %v355 = vmax.f32 %v353, %v354
        %v356 = vsub.f32 %v338, %v349
        %v357 = vsub.f32 %v340, %v355
        %v358 = vmul.f32 %v356, 1.442695
        %v359 = vpow.pop %v358
        %v360 = vmul.f32 %v357, 1.442695
        %v361 = vpow.pop %v360
        %v362 = vrot.slane %v359, 4
        %v363 = vadd.f32 %v359, %v362
        %v364 = vrot.slane %v363, 2
        %v365 = vadd.f32 %v363, %v364
        %v366 = vrot.slane %v365, 1
        %v367 = vadd.f32 %v365, %v366
        %v368 = vrot.slane %v361, 4
        %v369 = vadd.f32 %v361, %v368
        %v370 = vrot.slane %v369, 2
        %v371 = vadd.f32 %v369, %v370
        %v372 = vrot.slane %v371, 1
        %v373 = vadd.f32 %v371, %v372
        %v374 = vrcp.pop %v367
        %v375 = vmul.f32 %v359, %v374
        %v376 = vrcp.pop %v373
        %v377 = vmul.f32 %v361, %v376
        %378 = vst [vmem:[%s262] sm:$0xff] %v375
        %379 = vst [vmem:[%s262 + $0x8] sm:$0xff] %v377
        %v380 = vld [vmem:[%s3] sm:$0xf]
        %v381 = vld [vmem:[%s4] sm:$0xff]
        %383 = vset.pattern.permute.xlu0 0
        %384 = vperm.xlu0 %383, %v381
        %v385 = vpop.permute.xlu0 %384
        %v388 = vsel %vm292, %v380, 0
        %390 = vmatprep.subr.bf16.mxu0 0
        %391 = vmatpush1.bf16.msra.mxu0 0
        %392 = vmatprep.subr.bf16.mxu0 0
        %393 = vmatpush1.bf16.msra.mxu0 0
        %394 = vmatprep.subr.bf16.mxu0 0
        %395 = vmatpush1.bf16.msra.mxu0 0
        %396 = vmatprep.subr.bf16.mxu0 0
        %397 = vmatpush1.bf16.msra.mxu0 0
        %398 = vmatprep.subr.bf16.mxu0 0
        %399 = vmatpush1.bf16.msra.mxu0 0
        %400 = vmatprep.subr.bf16.mxu0 0
        %401 = vmatpush1.bf16.msra.mxu0 0
        %402 = vmatprep.subr.bf16.mxu0 0
        %403 = vmatpush1.bf16.msra.mxu0 0
        %404 = vmatprep.subr.bf16.mxu0 %v301
        %405 = vmatpush1.bf16.msra.mxu0 %v298
        %406 = vmatprep.subr.bf16.mxu0 0
        %407 = vmatpush2.bf16.msra.mxu0 0
        %408 = vmatprep.subr.bf16.mxu0 0
        %409 = vmatpush2.bf16.msra.mxu0 0
        %410 = vmatprep.subr.bf16.mxu0 0
        %411 = vmatpush2.bf16.msra.mxu0 0
        %412 = vmatprep.subr.bf16.mxu0 0
        %413 = vmatpush2.bf16.msra.mxu0 0
        %414 = vmatprep.subr.bf16.mxu0 0
        %415 = vmatpush2.bf16.msra.mxu0 0
        %416 = vmatprep.subr.bf16.mxu0 0
        %417 = vmatpush2.bf16.msra.mxu0 0
        %418 = vmatprep.subr.bf16.mxu0 0
        %419 = vmatpush2.bf16.msra.mxu0 0
        %420 = vmatprep.subr.bf16.mxu0 0
        %421 = vmatpush2.bf16.msra.mxu0 0
        %422 = vmatprep.mubr.bf16.mxu0 0
        %423 = vmatmul.mubr.bf16.gmra.mxu0 %v388
        %v424 = vpop.f32.mrf.mxu0
        %v425 = vadd.f32 %v385, %v424
        %v426 = vpop.f32.mrf.mxu0
        %v427 = vadd.f32 %v385, %v426
        %v428 = vpop.f32.mrf.mxu0
        %v429 = vpop.f32.mrf.mxu0
        %430 = vdwg.mxu0
        %v431 = vrot.slane %v425, 4
        %v432 = vmax.f32 %v425, %v431
        %v433 = vrot.slane %v432, 2
        %v434 = vmax.f32 %v432, %v433
        %v435 = vrot.slane %v434, 1
        %v436 = vmax.f32 %v434, %v435
        %v437 = vrot.slane %v427, 4
        %v438 = vmax.f32 %v427, %v437
        %v439 = vrot.slane %v438, 2
        %v440 = vmax.f32 %v438, %v439
        %v441 = vrot.slane %v440, 1
        %v442 = vmax.f32 %v440, %v441
        %v443 = vsub.f32 %v425, %v436
        %v444 = vsub.f32 %v427, %v442
        %v445 = vmul.f32 %v443, 1.442695
        %v446 = vpow.pop %v445
        %v447 = vmul.f32 %v444, 1.442695
        %v448 = vpow.pop %v447
        %v449 = vrot.slane %v446, 4
        %v450 = vadd.f32 %v446, %v449
        %v451 = vrot.slane %v450, 2
        %v452 = vadd.f32 %v450, %v451
        %v453 = vrot.slane %v452, 1
        %v454 = vadd.f32 %v452, %v453
        %v455 = vrot.slane %v448, 4
        %v456 = vadd.f32 %v448, %v455
        %v457 = vrot.slane %v456, 2
        %v458 = vadd.f32 %v456, %v457
        %v459 = vrot.slane %v458, 1
        %v460 = vadd.f32 %v458, %v459
        %v461 = vrcp.pop %v454
        %v462 = vmul.f32 %v446, %v461
        %v463 = vrcp.pop %v460
        %v464 = vmul.f32 %v448, %v463
        %465 = vst [vmem:[%s269] sm:$0xff] %v462
        %466 = vst [vmem:[%s269 + $0x8] sm:$0xff] %v464
        %s467 = sand.u32 %s143, 1
        %s468 = scalar_lea.sflag [#allocation4], %s467
        %s469 = sand.u32 %s143, 1
        %s470 = smul.addr %s469, 16
        %s471 = scalar_lea.vmem [#allocation5], %s470
        %s472 = sand.u32 %s169, 1
        %s473 = scalar_lea.sflag [#allocation7], %s472
        %s474 = sand.u32 %s169, 1
        %s475 = smul.addr %s474, 16
        %s476 = scalar_lea.vmem [#allocation6], %s475
        // Predicated region
        $region45: #{tpu_custom_call.1} parent=39 // pred_check
          %p477 = pneg %p153
        $region46: #{tpu_custom_call.1} parent=39 // pred_check_branch
          %479 = sbr.rel (%p477) target = $region48
        $region47: #{tpu_custom_call.1} parent=39 // pred_region
          %s480 = smul.u32 2, %s25
          %s482 = ssub.s32 256, 256
          %483 = vsyncadd %s468, %s482
          %s484 = smul.addr %s480, 128
          %s485 = scalar_lea.hbm %s5, %s484
          %s487 = sshll.u32 %s471, 4
          %s488 = int_to_ptr.vmem [resolvable:$true] %s487
          %490 = dma.vmem_to_hbm [thread:$0]  %s488, 256, %s485, %s468
        $region48: #{tpu_custom_call.1} parent=39 // pred_fallthru
          _
        // Predicated region
        $region49: #{tpu_custom_call.1} parent=39 // pred_check
          %p491 = pneg %p179
        $region50: #{tpu_custom_call.1} parent=39 // pred_check_branch
          %493 = sbr.rel (%p491) target = $region52
        $region51: #{tpu_custom_call.1} parent=39 // pred_region
          %s494 = smul.u32 2, %s25
          %s496 = ssub.s32 256, 256
          %497 = vsyncadd %s473, %s496
          %s498 = smul.addr %s494, 128
          %s499 = scalar_lea.hbm %s6, %s498
          %s501 = sshll.u32 %s476, 4
          %s502 = int_to_ptr.vmem [resolvable:$true] %s501
          %504 = dma.vmem_to_hbm [thread:$0]  %s502, 256, %s499, %s473
        $region52: #{tpu_custom_call.1} parent=39 // pred_fallthru
          _
      $region40: #{tpu_custom_call.1} parent=5 // pred_fallthru
        _
      %p505 = scmp.le.s32.totalorder 2, %s20
      // Predicated region
      $region53: #{tpu_custom_call.1} parent=5 // pred_check
        %p506 = pneg %p505
      $region54: #{tpu_custom_call.1} parent=5 // pred_check_branch
        %508 = sbr.rel (%p506) target = $region56
      $region55: #{tpu_custom_call.1} parent=5 // pred_region
        %s509 = ssub.s32 %s20, 2
        // Predicated region
        $region57: #{tpu_custom_call.1} parent=55 // pred_check
          %p510 = pneg %p159
        $region58: #{tpu_custom_call.1} parent=55 // pred_check_branch
          %512 = sbr.rel (%p510) target = $region60
        $region59: #{tpu_custom_call.1} parent=55 // pred_region
          %s513 = sand.u32 %s144, 1
          %s514 = scalar_lea.sflag [#allocation4], %s513
          %s515 = sand.u32 %s144, 1
          %s516 = smul.addr %s515, 16
          %s517 = scalar_lea.vmem [#allocation5], %s516
          %518 = dma.done %s514, 256
        $region60: #{tpu_custom_call.1} parent=55 // pred_fallthru
          _
        // Predicated region
        $region61: #{tpu_custom_call.1} parent=55 // pred_check
          %p519 = pneg %p185
        $region62: #{tpu_custom_call.1} parent=55 // pred_check_branch
          %521 = sbr.rel (%p519) target = $region64
        $region63: #{tpu_custom_call.1} parent=55 // pred_region
          %s522 = sand.u32 %s170, 1
          %s523 = scalar_lea.sflag [#allocation7], %s522
          %s524 = sand.u32 %s170, 1
          %s525 = smul.addr %s524, 16
          %s526 = scalar_lea.vmem [#allocation6], %s525
          %527 = dma.done %s523, 256
        $region64: #{tpu_custom_call.1} parent=55 // pred_fallthru
          _
      $region56: #{tpu_custom_call.1} parent=5 // pred_fallthru
        _
    $region6: #{tpu_custom_call.1} parent=1 // loop_footer
      %s24 = sadd.s32 1, %s20
    $region7: #{tpu_custom_call.1} parent=1 // loop_footer_branch
      %19 = sbr.rel target = $region3
    $region8: #{tpu_custom_call.1} parent=1 // loop_exit
      _
    %528 = vsyncpa [#allocation3], 1
    %s529 = scalar_lea.sflag [#allocation3], 1
    %530 = vsyncpa %s529, 1
    %531 = vsyncpa [#allocation4], 1
    %s532 = scalar_lea.sflag [#allocation4], 1
    %533 = vsyncpa %s532, 1
    %534 = vsyncpa [#allocation7], 1
    %s535 = scalar_lea.sflag [#allocation7], 1
    %536 = vsyncpa %s535, 1

</llo_original>
